<compile_context>
chip_gen: v6e
topology: v6e:2x2x1
jax: 0.10.0
libtpu: 0.0.40
codegen_flags: <defaults>
</compile_context>

<pallas_src>
import jax
import jax.numpy as jnp
from jax import lax
from jax.experimental import pallas as pl
from jax.experimental.pallas import tpu as pltpu


def _task_lstm_kernel(x_ref, wih_ref, whh_ref, b_ref, wout_ref, bout_ref,
                      out_ref):
    T = x_ref.shape[0]
    H = whh_ref.shape[0]

    # Input projection for all timesteps at once on the MXU:
    # (T, num_steps) @ (num_steps, 4H). Kept as a value (one vreg for the
    # example shapes) — no VMEM scratch round-trip.
    # (Default matmul precision: error vs. PyTorch f32 is tiny at these K dims;
    #  use precision=lax.Precision.HIGHEST on the dots if bit parity is needed.)
    xproj = (
        jnp.dot(x_ref[...], wih_ref[...], preferred_element_type=jnp.float32)
        + b_ref[...]
    )

    whh = whh_ref[...]

    h = jnp.zeros((1, H), jnp.float32)
    c = jnp.zeros((1, H), jnp.float32)

    # Fully unrolled recurrence: T is a small compile-time constant, so a
    # static Python loop == full unroll. xproj rows are static sublane slices.
    for t in range(T):
        gates = xproj[t:t + 1, :] + jnp.dot(
            h, whh, preferred_element_type=jnp.float32
        )
        # Two EUP pushes over the whole (1, 4H) gates vector, then static
        # lane-group extraction. PyTorch gate order: i, f, g, o.
        sig = jax.nn.sigmoid(gates)
        tnh = jnp.tanh(gates)
        i = sig[:, 0 * H:1 * H]
        f = sig[:, 1 * H:2 * H]
        g = tnh[:, 2 * H:3 * H]
        o = sig[:, 3 * H:4 * H]
        c = f * c + i * g
        h = o * jnp.tanh(c)

    # hidden2task linear + log_softmax on the last hidden state.
    logits = (
        jnp.dot(h, wout_ref[...], preferred_element_type=jnp.float32)
        + bout_ref[...]
    )
    m = jnp.max(logits, axis=1, keepdims=True)
    lse = m + jnp.log(jnp.sum(jnp.exp(logits - m), axis=1, keepdims=True))
    out_ref[...] = logits - lse


def task_lstm_head(step_scores, w_ih_t, w_hh_t, bias, w_out_t, b_out):
    """step_scores: (T, num_steps) f32 -> (1, num_tasks) f32 log-probs."""
    T, num_steps = step_scores.shape
    H, H4 = w_hh_t.shape
    num_tasks = w_out_t.shape[1]

    # Advisory cost hint: this kernel is tiny and latency-bound.
    flops = 2 * T * (num_steps + H) * H4 + 2 * H * num_tasks
    transcendentals = T * (2 * H4 + H) + 2 * num_tasks
    bytes_accessed = 4 * (step_scores.size + w_ih_t.size + w_hh_t.size
                          + bias.size + w_out_t.size + b_out.size + num_tasks)

    return pl.pallas_call(
        _task_lstm_kernel,
        out_shape=jax.ShapeDtypeStruct((1, num_tasks), jnp.float32),
        in_specs=[pl.BlockSpec(memory_space=pltpu.MemorySpace.VMEM)] * 6,
        out_specs=pl.BlockSpec(memory_space=pltpu.MemorySpace.VMEM),
        cost_estimate=pl.CostEstimate(
            flops=flops,
            transcendentals=transcendentals,
            bytes_accessed=bytes_accessed,
        ),
    )(step_scores, w_ih_t, w_hh_t, bias, w_out_t, b_out)


def init_params(key, num_steps, num_tasks, hidden_dim):
    """Deterministic PyTorch-style uniform init (synthetic weights)."""
    k_lstm = 1.0 / jnp.sqrt(hidden_dim)
    k_lin = 1.0 / jnp.sqrt(hidden_dim)
    ks = jax.random.split(key, 6)
    w_ih = jax.random.uniform(ks[0], (4 * hidden_dim, num_steps),
                              minval=-k_lstm, maxval=k_lstm, dtype=jnp.float32)
    w_hh = jax.random.uniform(ks[1], (4 * hidden_dim, hidden_dim),
                              minval=-k_lstm, maxval=k_lstm, dtype=jnp.float32)
    b_ih = jax.random.uniform(ks[2], (4 * hidden_dim,),
                              minval=-k_lstm, maxval=k_lstm, dtype=jnp.float32)
    b_hh = jax.random.uniform(ks[3], (4 * hidden_dim,),
                              minval=-k_lstm, maxval=k_lstm, dtype=jnp.float32)
    w_out = jax.random.uniform(ks[4], (num_tasks, hidden_dim),
                               minval=-k_lin, maxval=k_lin, dtype=jnp.float32)
    b_out = jax.random.uniform(ks[5], (num_tasks,),
                               minval=-k_lin, maxval=k_lin, dtype=jnp.float32)
    return dict(
        w_ih_t=w_ih.T,                               # (num_steps, 4H)
        w_hh_t=w_hh.T,                               # (H, 4H)
        bias=(b_ih + b_hh).reshape(1, -1),           # (1, 4H)
        w_out_t=w_out.T,                             # (H, num_tasks)
        b_out=b_out.reshape(1, -1),                  # (1, num_tasks)
    )


if __name__ == "__main__":
    # Small shapes consistent with the module's forward
    seq_len, num_steps, hidden_dim, num_tasks = 8, 16, 32, 8

    key = jax.random.PRNGKey(0)
    k_x, k_p = jax.random.split(key)
    step_scores = jax.random.normal(k_x, (seq_len, num_steps), dtype=jnp.float32)
    params = init_params(k_p, num_steps, num_tasks, hidden_dim)

    task_log_probs = task_lstm_head(step_scores, params["w_ih_t"],
                                    params["w_hh_t"], params["bias"],
                                    params["w_out_t"], params["b_out"])
    jax.block_until_ready(task_log_probs)
    assert task_log_probs.shape == (1, num_tasks)
    print("KERNEL_OK")
</pallas_src>

<mosaic_0001>
module attributes {stable_mosaic.version = 11 : i64} {
  func.func @_task_lstm_kernel(%arg0: memref<8x16xf32, #tpu.memory_space<vmem>>, %arg1: memref<16x128xf32, #tpu.memory_space<vmem>>, %arg2: memref<32x128xf32, #tpu.memory_space<vmem>>, %arg3: memref<1x128xf32, #tpu.memory_space<vmem>>, %arg4: memref<32x8xf32, #tpu.memory_space<vmem>>, %arg5: memref<1x8xf32, #tpu.memory_space<vmem>>, %arg6: memref<1x8xf32, #tpu.memory_space<vmem>>) attributes {dimension_semantics = [], scalar_prefetch = 0 : i64, scratch_operands = 0 : i64, tpu.core_type = #tpu.core_type<tc>} {
    %c0 = arith.constant 0 : index
    %c0_0 = arith.constant 0 : index
    %0 = vector.load %arg0[%c0, %c0_0] : memref<8x16xf32, #tpu.memory_space<vmem>>, vector<8x16xf32>
    %c0_1 = arith.constant 0 : index
    %c0_2 = arith.constant 0 : index
    %1 = vector.load %arg1[%c0_1, %c0_2] : memref<16x128xf32, #tpu.memory_space<vmem>>, vector<16x128xf32>
    %cst = arith.constant dense<0.000000e+00> : vector<8x128xf32>
    %2 = tpu.matmul %0, %1, %cst {dimension_numbers = #tpu.dot_dimension_numbers<[1], [0], [0], [1], [0, 0, 1, 1], [], []>} : vector<8x16xf32>, vector<16x128xf32>, vector<8x128xf32> -> vector<8x128xf32>
    %c0_3 = arith.constant 0 : index
    %c0_4 = arith.constant 0 : index
    %3 = vector.load %arg3[%c0_3, %c0_4] : memref<1x128xf32, #tpu.memory_space<vmem>>, vector<1x128xf32>
    %4 = vector.broadcast %3 : vector<1x128xf32> to vector<8x128xf32>
    %5 = arith.addf %2, %4 : vector<8x128xf32>
    %c0_5 = arith.constant 0 : index
    %c0_6 = arith.constant 0 : index
    %6 = vector.load %arg2[%c0_5, %c0_6] : memref<32x128xf32, #tpu.memory_space<vmem>>, vector<32x128xf32>
    %cst_7 = arith.constant 0.000000e+00 : f32
    %7 = vector.broadcast %cst_7 : f32 to vector<1x32xf32>
    %cst_8 = arith.constant 0.000000e+00 : f32
    %8 = vector.broadcast %cst_8 : f32 to vector<1x32xf32>
    %9 = vector.extract_strided_slice %5 {offsets = [0, 0], sizes = [1, 128], strides = [1, 1]} : vector<8x128xf32> to vector<1x128xf32>
    %cst_9 = arith.constant dense<0.000000e+00> : vector<1x128xf32>
    %10 = tpu.matmul %7, %6, %cst_9 {dimension_numbers = #tpu.dot_dimension_numbers<[1], [0], [0], [1], [0, 0, 1, 1], [], []>} : vector<1x32xf32>, vector<32x128xf32>, vector<1x128xf32> -> vector<1x128xf32>
    %11 = arith.addf %9, %10 : vector<1x128xf32>
    %12 = arith.negf %11 : vector<1x128xf32>
    %13 = math.exp %12 : vector<1x128xf32>
    %cst_10 = arith.constant 1.000000e+00 : f32
    %14 = vector.broadcast %cst_10 : f32 to vector<1x128xf32>
    %15 = arith.addf %14, %13 : vector<1x128xf32>
    %16 = arith.divf %14, %15 : vector<1x128xf32>
    %17 = math.tanh %11 : vector<1x128xf32>
    %18 = vector.extract_strided_slice %16 {offsets = [0, 0], sizes = [1, 32], strides = [1, 1]} : vector<1x128xf32> to vector<1x32xf32>
    %19 = vector.extract_strided_slice %16 {offsets = [0, 32], sizes = [1, 32], strides = [1, 1]} : vector<1x128xf32> to vector<1x32xf32>
    %20 = vector.extract_strided_slice %17 {offsets = [0, 64], sizes = [1, 32], strides = [1, 1]} : vector<1x128xf32> to vector<1x32xf32>
    %21 = vector.extract_strided_slice %16 {offsets = [0, 96], sizes = [1, 32], strides = [1, 1]} : vector<1x128xf32> to vector<1x32xf32>
    %22 = arith.mulf %19, %8 : vector<1x32xf32>
    %23 = arith.mulf %18, %20 : vector<1x32xf32>
    %24 = arith.addf %22, %23 : vector<1x32xf32>
    %25 = math.tanh %24 : vector<1x32xf32>
    %26 = arith.mulf %21, %25 : vector<1x32xf32>
    %27 = vector.extract_strided_slice %5 {offsets = [1, 0], sizes = [1, 128], strides = [1, 1]} : vector<8x128xf32> to vector<1x128xf32>
    %cst_11 = arith.constant dense<0.000000e+00> : vector<1x128xf32>
    %28 = tpu.matmul %26, %6, %cst_11 {dimension_numbers = #tpu.dot_dimension_numbers<[1], [0], [0], [1], [0, 0, 1, 1], [], []>} : vector<1x32xf32>, vector<32x128xf32>, vector<1x128xf32> -> vector<1x128xf32>
    %29 = arith.addf %27, %28 : vector<1x128xf32>
    %30 = arith.negf %29 : vector<1x128xf32>
    %31 = math.exp %30 : vector<1x128xf32>
    %cst_12 = arith.constant 1.000000e+00 : f32
    %32 = vector.broadcast %cst_12 : f32 to vector<1x128xf32>
    %33 = arith.addf %32, %31 : vector<1x128xf32>
    %34 = arith.divf %32, %33 : vector<1x128xf32>
    %35 = math.tanh %29 : vector<1x128xf32>
    %36 = vector.extract_strided_slice %34 {offsets = [0, 0], sizes = [1, 32], strides = [1, 1]} : vector<1x128xf32> to vector<1x32xf32>
    %37 = vector.extract_strided_slice %34 {offsets = [0, 32], sizes = [1, 32], strides = [1, 1]} : vector<1x128xf32> to vector<1x32xf32>
    %38 = vector.extract_strided_slice %35 {offsets = [0, 64], sizes = [1, 32], strides = [1, 1]} : vector<1x128xf32> to vector<1x32xf32>
    %39 = vector.extract_strided_slice %34 {offsets = [0, 96], sizes = [1, 32], strides = [1, 1]} : vector<1x128xf32> to vector<1x32xf32>
    %40 = arith.mulf %37, %24 : vector<1x32xf32>
    %41 = arith.mulf %36, %38 : vector<1x32xf32>
    %42 = arith.addf %40, %41 : vector<1x32xf32>
    %43 = math.tanh %42 : vector<1x32xf32>
    %44 = arith.mulf %39, %43 : vector<1x32xf32>
    %45 = vector.extract_strided_slice %5 {offsets = [2, 0], sizes = [1, 128], strides = [1, 1]} : vector<8x128xf32> to vector<1x128xf32>
    %cst_13 = arith.constant dense<0.000000e+00> : vector<1x128xf32>
    %46 = tpu.matmul %44, %6, %cst_13 {dimension_numbers = #tpu.dot_dimension_numbers<[1], [0], [0], [1], [0, 0, 1, 1], [], []>} : vector<1x32xf32>, vector<32x128xf32>, vector<1x128xf32> -> vector<1x128xf32>
    %47 = arith.addf %45, %46 : vector<1x128xf32>
    %48 = arith.negf %47 : vector<1x128xf32>
    %49 = math.exp %48 : vector<1x128xf32>
    %cst_14 = arith.constant 1.000000e+00 : f32
    %50 = vector.broadcast %cst_14 : f32 to vector<1x128xf32>
    %51 = arith.addf %50, %49 : vector<1x128xf32>
    %52 = arith.divf %50, %51 : vector<1x128xf32>
    %53 = math.tanh %47 : vector<1x128xf32>
    %54 = vector.extract_strided_slice %52 {offsets = [0, 0], sizes = [1, 32], strides = [1, 1]} : vector<1x128xf32> to vector<1x32xf32>
    %55 = vector.extract_strided_slice %52 {offsets = [0, 32], sizes = [1, 32], strides = [1, 1]} : vector<1x128xf32> to vector<1x32xf32>
    %56 = vector.extract_strided_slice %53 {offsets = [0, 64], sizes = [1, 32], strides = [1, 1]} : vector<1x128xf32> to vector<1x32xf32>
    %57 = vector.extract_strided_slice %52 {offsets = [0, 96], sizes = [1, 32], strides = [1, 1]} : vector<1x128xf32> to vector<1x32xf32>
    %58 = arith.mulf %55, %42 : vector<1x32xf32>
    %59 = arith.mulf %54, %56 : vector<1x32xf32>
    %60 = arith.addf %58, %59 : vector<1x32xf32>
    %61 = math.tanh %60 : vector<1x32xf32>
    %62 = arith.mulf %57, %61 : vector<1x32xf32>
    %63 = vector.extract_strided_slice %5 {offsets = [3, 0], sizes = [1, 128], strides = [1, 1]} : vector<8x128xf32> to vector<1x128xf32>
    %cst_15 = arith.constant dense<0.000000e+00> : vector<1x128xf32>
    %64 = tpu.matmul %62, %6, %cst_15 {dimension_numbers = #tpu.dot_dimension_numbers<[1], [0], [0], [1], [0, 0, 1, 1], [], []>} : vector<1x32xf32>, vector<32x128xf32>, vector<1x128xf32> -> vector<1x128xf32>
    %65 = arith.addf %63, %64 : vector<1x128xf32>
    %66 = arith.negf %65 : vector<1x128xf32>
    %67 = math.exp %66 : vector<1x128xf32>
    %cst_16 = arith.constant 1.000000e+00 : f32
    %68 = vector.broadcast %cst_16 : f32 to vector<1x128xf32>
    %69 = arith.addf %68, %67 : vector<1x128xf32>
    %70 = arith.divf %68, %69 : vector<1x128xf32>
    %71 = math.tanh %65 : vector<1x128xf32>
    %72 = vector.extract_strided_slice %70 {offsets = [0, 0], sizes = [1, 32], strides = [1, 1]} : vector<1x128xf32> to vector<1x32xf32>
    %73 = vector.extract_strided_slice %70 {offsets = [0, 32], sizes = [1, 32], strides = [1, 1]} : vector<1x128xf32> to vector<1x32xf32>
    %74 = vector.extract_strided_slice %71 {offsets = [0, 64], sizes = [1, 32], strides = [1, 1]} : vector<1x128xf32> to vector<1x32xf32>
    %75 = vector.extract_strided_slice %70 {offsets = [0, 96], sizes = [1, 32], strides = [1, 1]} : vector<1x128xf32> to vector<1x32xf32>
    %76 = arith.mulf %73, %60 : vector<1x32xf32>
    %77 = arith.mulf %72, %74 : vector<1x32xf32>
    %78 = arith.addf %76, %77 : vector<1x32xf32>
    %79 = math.tanh %78 : vector<1x32xf32>
    %80 = arith.mulf %75, %79 : vector<1x32xf32>
    %81 = vector.extract_strided_slice %5 {offsets = [4, 0], sizes = [1, 128], strides = [1, 1]} : vector<8x128xf32> to vector<1x128xf32>
    %cst_17 = arith.constant dense<0.000000e+00> : vector<1x128xf32>
    %82 = tpu.matmul %80, %6, %cst_17 {dimension_numbers = #tpu.dot_dimension_numbers<[1], [0], [0], [1], [0, 0, 1, 1], [], []>} : vector<1x32xf32>, vector<32x128xf32>, vector<1x128xf32> -> vector<1x128xf32>
    %83 = arith.addf %81, %82 : vector<1x128xf32>
    %84 = arith.negf %83 : vector<1x128xf32>
    %85 = math.exp %84 : vector<1x128xf32>
    %cst_18 = arith.constant 1.000000e+00 : f32
    %86 = vector.broadcast %cst_18 : f32 to vector<1x128xf32>
    %87 = arith.addf %86, %85 : vector<1x128xf32>
    %88 = arith.divf %86, %87 : vector<1x128xf32>
    %89 = math.tanh %83 : vector<1x128xf32>
    %90 = vector.extract_strided_slice %88 {offsets = [0, 0], sizes = [1, 32], strides = [1, 1]} : vector<1x128xf32> to vector<1x32xf32>
    %91 = vector.extract_strided_slice %88 {offsets = [0, 32], sizes = [1, 32], strides = [1, 1]} : vector<1x128xf32> to vector<1x32xf32>
    %92 = vector.extract_strided_slice %89 {offsets = [0, 64], sizes = [1, 32], strides = [1, 1]} : vector<1x128xf32> to vector<1x32xf32>
    %93 = vector.extract_strided_slice %88 {offsets = [0, 96], sizes = [1, 32], strides = [1, 1]} : vector<1x128xf32> to vector<1x32xf32>
    %94 = arith.mulf %91, %78 : vector<1x32xf32>
    %95 = arith.mulf %90, %92 : vector<1x32xf32>
    %96 = arith.addf %94, %95 : vector<1x32xf32>
    %97 = math.tanh %96 : vector<1x32xf32>
    %98 = arith.mulf %93, %97 : vector<1x32xf32>
    %99 = vector.extract_strided_slice %5 {offsets = [5, 0], sizes = [1, 128], strides = [1, 1]} : vector<8x128xf32> to vector<1x128xf32>
    %cst_19 = arith.constant dense<0.000000e+00> : vector<1x128xf32>
    %100 = tpu.matmul %98, %6, %cst_19 {dimension_numbers = #tpu.dot_dimension_numbers<[1], [0], [0], [1], [0, 0, 1, 1], [], []>} : vector<1x32xf32>, vector<32x128xf32>, vector<1x128xf32> -> vector<1x128xf32>
    %101 = arith.addf %99, %100 : vector<1x128xf32>
    %102 = arith.negf %101 : vector<1x128xf32>
    %103 = math.exp %102 : vector<1x128xf32>
    %cst_20 = arith.constant 1.000000e+00 : f32
    %104 = vector.broadcast %cst_20 : f32 to vector<1x128xf32>
    %105 = arith.addf %104, %103 : vector<1x128xf32>
    %106 = arith.divf %104, %105 : vector<1x128xf32>
    %107 = math.tanh %101 : vector<1x128xf32>
    %108 = vector.extract_strided_slice %106 {offsets = [0, 0], sizes = [1, 32], strides = [1, 1]} : vector<1x128xf32> to vector<1x32xf32>
    %109 = vector.extract_strided_slice %106 {offsets = [0, 32], sizes = [1, 32], strides = [1, 1]} : vector<1x128xf32> to vector<1x32xf32>
    %110 = vector.extract_strided_slice %107 {offsets = [0, 64], sizes = [1, 32], strides = [1, 1]} : vector<1x128xf32> to vector<1x32xf32>
    %111 = vector.extract_strided_slice %106 {offsets = [0, 96], sizes = [1, 32], strides = [1, 1]} : vector<1x128xf32> to vector<1x32xf32>
    %112 = arith.mulf %109, %96 : vector<1x32xf32>
    %113 = arith.mulf %108, %110 : vector<1x32xf32>
    %114 = arith.addf %112, %113 : vector<1x32xf32>
    %115 = math.tanh %114 : vector<1x32xf32>
    %116 = arith.mulf %111, %115 : vector<1x32xf32>
    %117 = vector.extract_strided_slice %5 {offsets = [6, 0], sizes = [1, 128], strides = [1, 1]} : vector<8x128xf32> to vector<1x128xf32>
    %cst_21 = arith.constant dense<0.000000e+00> : vector<1x128xf32>
    %118 = tpu.matmul %116, %6, %cst_21 {dimension_numbers = #tpu.dot_dimension_numbers<[1], [0], [0], [1], [0, 0, 1, 1], [], []>} : vector<1x32xf32>, vector<32x128xf32>, vector<1x128xf32> -> vector<1x128xf32>
    %119 = arith.addf %117, %118 : vector<1x128xf32>
    %120 = arith.negf %119 : vector<1x128xf32>
    %121 = math.exp %120 : vector<1x128xf32>
    %cst_22 = arith.constant 1.000000e+00 : f32
    %122 = vector.broadcast %cst_22 : f32 to vector<1x128xf32>
    %123 = arith.addf %122, %121 : vector<1x128xf32>
    %124 = arith.divf %122, %123 : vector<1x128xf32>
    %125 = math.tanh %119 : vector<1x128xf32>
    %126 = vector.extract_strided_slice %124 {offsets = [0, 0], sizes = [1, 32], strides = [1, 1]} : vector<1x128xf32> to vector<1x32xf32>
    %127 = vector.extract_strided_slice %124 {offsets = [0, 32], sizes = [1, 32], strides = [1, 1]} : vector<1x128xf32> to vector<1x32xf32>
    %128 = vector.extract_strided_slice %125 {offsets = [0, 64], sizes = [1, 32], strides = [1, 1]} : vector<1x128xf32> to vector<1x32xf32>
    %129 = vector.extract_strided_slice %124 {offsets = [0, 96], sizes = [1, 32], strides = [1, 1]} : vector<1x128xf32> to vector<1x32xf32>
    %130 = arith.mulf %127, %114 : vector<1x32xf32>
    %131 = arith.mulf %126, %128 : vector<1x32xf32>
    %132 = arith.addf %130, %131 : vector<1x32xf32>
    %133 = math.tanh %132 : vector<1x32xf32>
    %134 = arith.mulf %129, %133 : vector<1x32xf32>
    %135 = vector.extract_strided_slice %5 {offsets = [7, 0], sizes = [1, 128], strides = [1, 1]} : vector<8x128xf32> to vector<1x128xf32>
    %cst_23 = arith.constant dense<0.000000e+00> : vector<1x128xf32>
    %136 = tpu.matmul %134, %6, %cst_23 {dimension_numbers = #tpu.dot_dimension_numbers<[1], [0], [0], [1], [0, 0, 1, 1], [], []>} : vector<1x32xf32>, vector<32x128xf32>, vector<1x128xf32> -> vector<1x128xf32>
    %137 = arith.addf %135, %136 : vector<1x128xf32>
    %138 = arith.negf %137 : vector<1x128xf32>
    %139 = math.exp %138 : vector<1x128xf32>
    %cst_24 = arith.constant 1.000000e+00 : f32
    %140 = vector.broadcast %cst_24 : f32 to vector<1x128xf32>
    %141 = arith.addf %140, %139 : vector<1x128xf32>
    %142 = arith.divf %140, %141 : vector<1x128xf32>
    %143 = math.tanh %137 : vector<1x128xf32>
    %144 = vector.extract_strided_slice %142 {offsets = [0, 0], sizes = [1, 32], strides = [1, 1]} : vector<1x128xf32> to vector<1x32xf32>
    %145 = vector.extract_strided_slice %142 {offsets = [0, 32], sizes = [1, 32], strides = [1, 1]} : vector<1x128xf32> to vector<1x32xf32>
    %146 = vector.extract_strided_slice %143 {offsets = [0, 64], sizes = [1, 32], strides = [1, 1]} : vector<1x128xf32> to vector<1x32xf32>
    %147 = vector.extract_strided_slice %142 {offsets = [0, 96], sizes = [1, 32], strides = [1, 1]} : vector<1x128xf32> to vector<1x32xf32>
    %148 = arith.mulf %145, %132 : vector<1x32xf32>
    %149 = arith.mulf %144, %146 : vector<1x32xf32>
    %150 = arith.addf %148, %149 : vector<1x32xf32>
    %151 = math.tanh %150 : vector<1x32xf32>
    %152 = arith.mulf %147, %151 : vector<1x32xf32>
    %c0_25 = arith.constant 0 : index
    %c0_26 = arith.constant 0 : index
    %153 = vector.load %arg4[%c0_25, %c0_26] : memref<32x8xf32, #tpu.memory_space<vmem>>, vector<32x8xf32>
    %cst_27 = arith.constant dense<0.000000e+00> : vector<1x8xf32>
    %154 = tpu.matmul %152, %153, %cst_27 {dimension_numbers = #tpu.dot_dimension_numbers<[1], [0], [0], [1], [0, 0, 1, 1], [], []>} : vector<1x32xf32>, vector<32x8xf32>, vector<1x8xf32> -> vector<1x8xf32>
    %c0_28 = arith.constant 0 : index
    %c0_29 = arith.constant 0 : index
    %155 = vector.load %arg5[%c0_28, %c0_29] : memref<1x8xf32, #tpu.memory_space<vmem>>, vector<1x8xf32>
    %156 = arith.addf %154, %155 : vector<1x8xf32>
    %cst_30 = arith.constant dense<0xFF800000> : vector<1xf32>
    %157 = vector.multi_reduction <maximumf>, %156, %cst_30 [1] : vector<1x8xf32> to vector<1xf32>
    %158 = vector.shape_cast %157 : vector<1xf32> to vector<1x1xf32>
    %159 = vector.broadcast %158 : vector<1x1xf32> to vector<1x8xf32>
    %160 = arith.subf %156, %159 : vector<1x8xf32>
    %161 = math.exp %160 : vector<1x8xf32>
    %cst_31 = arith.constant dense<0.000000e+00> : vector<1xf32>
    %162 = vector.multi_reduction <add>, %161, %cst_31 [1] : vector<1x8xf32> to vector<1xf32>
    %163 = vector.shape_cast %162 : vector<1xf32> to vector<1x1xf32>
    %164 = math.log %163 : vector<1x1xf32>
    %165 = arith.addf %158, %164 : vector<1x1xf32>
    %166 = vector.broadcast %165 : vector<1x1xf32> to vector<1x8xf32>
    %167 = arith.subf %156, %166 : vector<1x8xf32>
    %c0_32 = arith.constant 0 : index
    %c0_33 = arith.constant 0 : index
    %168 = vector.load %arg6[%c0_32, %c0_33] : memref<1x8xf32, #tpu.memory_space<vmem>>, vector<1x8xf32>
    tpu.vector_store %arg6[%c0_32, %c0_33], %167 {strides = array<i32>} : memref<1x8xf32, #tpu.memory_space<vmem>>, vector<1x8xf32>,
    return
  }
}

</mosaic_0001>

<llo_original>
// kernel: tpu_custom_call.1
$region0: #{tpu_custom_call.1}
  #allocation0 [shape = 'u32[]', space=smem, size = 0x4, offset = 0x4, fixed_abs, tag = 'smem constant byte address 0x4 - core index']
  #allocation1 [shape = 'u32[144,128]{1,0:T(1,128)}', space=vmem, size = 0x12000, scoped, tag = 'internal scratch']
  %s0 = inlined_call_operand.vmem [shape: f32[8,16], index: 0, kind: input, shape index: {}]
  %s1 = inlined_call_operand.hbm [shape: f32[16,128], index: 1, kind: input, shape index: {}]
  %s2 = inlined_call_operand.vmem [shape: f32[32,128], index: 2, kind: input, shape index: {}]
  %s3 = inlined_call_operand.vmem [shape: f32[1,128], index: 3, kind: input, shape index: {}]
  %s4 = inlined_call_operand.vmem [shape: f32[32,8], index: 4, kind: input, shape index: {}]
  %s5 = inlined_call_operand.vmem [shape: f32[1,8], index: 5, kind: input, shape index: {}]
  %s6 = inlined_call_operand.hbm [shape: f32[1,8], index: 6, kind: output, shape index: {}]
  %s7 = sld [smem:[#allocation0]]
  $region38: #{tpu_custom_call.1} parent=0
    _
  %s9 = ssub.s32 1, %s7
  %s10 = scalar_select 0, %s9, %s7
  $region1: #{tpu_custom_call.1} parent=0
    #allocation2 [shape = 'u8[8192]{0}', space=vmem, size = 0x2000, scoped, tag = 'input window, operand 1, single buffered']
    #allocation3 [shape = 's32[1]{0}', space=sflag, size = 0x4, scoped, tag = 'scoped memory for tpu_custom_call.1']
    #allocation4 [shape = 's32[1]{0}', space=sflag, size = 0x4, scoped, tag = 'scoped memory for tpu_custom_call.1']
    #allocation5 [shape = 'u8[512]{0}', space=vmem, size = 0x400, scoped, tag = 'output window, operand 0, single buffered']
    %11 = vsyncpa [#allocation3], 0
    %12 = vsyncpa [#allocation4], 0
    // Predicated region
    $region2: #{tpu_custom_call.1} parent=1 // pred_check
      _
    $region3: #{tpu_custom_call.1} parent=1 // pred_check_branch
      %14 = sbr.rel (0) target = $region5
    $region4: #{tpu_custom_call.1} parent=1 // pred_region
      _
    $region5: #{tpu_custom_call.1} parent=1 // pred_fallthru
      _
    // Predicated region
    $region6: #{tpu_custom_call.1} parent=1 // pred_check
      _
    $region7: #{tpu_custom_call.1} parent=1 // pred_check_branch
      %16 = sbr.rel (0) target = $region9
    $region8: #{tpu_custom_call.1} parent=1 // pred_region
      %s18 = ssub.s32 256, 256
      %19 = vsyncadd [#allocation3], %s18
      %s20 = sshll.u32 [#allocation2], 4
      %s21 = int_to_ptr.vmem [resolvable:$true] %s20
      %26 = dma.hbm_to_vmem [thread:$0]  %s1, 256, %s21, [#allocation3], 128, 128, 8
    $region9: #{tpu_custom_call.1} parent=1 // pred_fallthru
      _
    // Predicated region
    $region10: #{tpu_custom_call.1} parent=1 // pred_check
      _
    $region11: #{tpu_custom_call.1} parent=1 // pred_check_branch
      %28 = sbr.rel (0) target = $region13
    $region12: #{tpu_custom_call.1} parent=1 // pred_region
      _
    $region13: #{tpu_custom_call.1} parent=1 // pred_fallthru
      _
    // Predicated region
    $region14: #{tpu_custom_call.1} parent=1 // pred_check
      _
    $region15: #{tpu_custom_call.1} parent=1 // pred_check_branch
      %30 = sbr.rel (0) target = $region17
    $region16: #{tpu_custom_call.1} parent=1 // pred_region
      _
    $region17: #{tpu_custom_call.1} parent=1 // pred_fallthru
      _
    // Predicated region
    $region18: #{tpu_custom_call.1} parent=1 // pred_check
      _
    $region19: #{tpu_custom_call.1} parent=1 // pred_check_branch
      %32 = sbr.rel (0) target = $region21
    $region20: #{tpu_custom_call.1} parent=1 // pred_region
      _
    $region21: #{tpu_custom_call.1} parent=1 // pred_fallthru
      _
    // Predicated region
    $region22: #{tpu_custom_call.1} parent=1 // pred_check
      _
    $region23: #{tpu_custom_call.1} parent=1 // pred_check_branch
      %34 = sbr.rel (0) target = $region25
    $region24: #{tpu_custom_call.1} parent=1 // pred_region
      _
    $region25: #{tpu_custom_call.1} parent=1 // pred_fallthru
      _
    // Predicated region
    $region26: #{tpu_custom_call.1} parent=1 // pred_check
      _
    $region27: #{tpu_custom_call.1} parent=1 // pred_check_branch
      %36 = sbr.rel (0) target = $region29
    $region28: #{tpu_custom_call.1} parent=1 // pred_region
      %37 = dma.done [#allocation3], 256
    $region29: #{tpu_custom_call.1} parent=1 // pred_fallthru
      _
    %v38 = vld [vmem:[%s0] sm:$0xff]
    %v39 = vld [vmem:[#allocation2] sm:$0xff]
    %v40 = vld [vmem:[#allocation2 + $0x8] sm:$0xff]
    %v41 = vld [vmem:[%s3] sm:$0x1]
    %v43 = vlaneseq
    %v44 = vshrl.u32 %v43, 7
    %v45 = vsub.s32 0, %v44
    %v46 = vrot.slane %v41, %v45
    %vm48 = vcmask 130048
    %v50 = vsel %vm48, %v38, 0
    %52 = vmatprep.subr.mxu0 0.0
    %53 = vmatpush1.msra.mxu0 0.0
    %54 = vmatprep.subr.mxu0 0.0
    %55 = vmatpush1.msra.mxu0 0.0
    %56 = vmatprep.subr.mxu0 0.0
    %57 = vmatpush1.msra.mxu0 0.0
    %58 = vmatprep.subr.mxu0 0.0
    %59 = vmatpush1.msra.mxu0 0.0
    %60 = vmatprep.subr.mxu0 0.0
    %61 = vmatpush1.msra.mxu0 0.0
    %62 = vmatprep.subr.mxu0 0.0
    %63 = vmatpush1.msra.mxu0 0.0
    %64 = vmatprep.subr.mxu0 0.0
    %65 = vmatpush1.msra.mxu0 0.0
    %66 = vmatprep.subr.mxu0 0.0
    %67 = vmatpush1.msra.mxu0 0.0
    %68 = vmatprep.subr.mxu0 0.0
    %69 = vmatpush1.msra.mxu0 0.0
    %70 = vmatprep.subr.mxu0 0.0
    %71 = vmatpush1.msra.mxu0 0.0
    %72 = vmatprep.subr.mxu0 0.0
    %73 = vmatpush1.msra.mxu0 0.0
    %74 = vmatprep.subr.mxu0 0.0
    %75 = vmatpush1.msra.mxu0 0.0
    %76 = vmatprep.subr.mxu0 0.0
    %77 = vmatpush1.msra.mxu0 0.0
    %78 = vmatprep.subr.mxu0 0.0
    %79 = vmatpush1.msra.mxu0 0.0
    %80 = vmatprep.subr.mxu0 0.0
    %81 = vmatpush1.msra.mxu0 %v40
    %82 = vmatprep.subr.mxu0 0.0
    %83 = vmatpush1.msra.mxu0 %v39
    %84 = vmatprep.subr.mxu0 0.0
    %85 = vmatpush2.msra.mxu0 0.0
    %86 = vmatprep.subr.mxu0 0.0
    %87 = vmatpush2.msra.mxu0 0.0
    %88 = vmatprep.subr.mxu0 0.0
    %89 = vmatpush2.msra.mxu0 0.0
    %90 = vmatprep.subr.mxu0 0.0
    %91 = vmatpush2.msra.mxu0 0.0
    %92 = vmatprep.subr.mxu0 0.0
    %93 = vmatpush2.msra.mxu0 0.0
    %94 = vmatprep.subr.mxu0 0.0
    %95 = vmatpush2.msra.mxu0 0.0
    %96 = vmatprep.subr.mxu0 0.0
    %97 = vmatpush2.msra.mxu0 0.0
    %98 = vmatprep.subr.mxu0 0.0
    %99 = vmatpush2.msra.mxu0 0.0
    %100 = vmatprep.subr.mxu0 0.0
    %101 = vmatpush2.msra.mxu0 0.0
    %102 = vmatprep.subr.mxu0 0.0
    %103 = vmatpush2.msra.mxu0 0.0
    %104 = vmatprep.subr.mxu0 0.0
    %105 = vmatpush2.msra.mxu0 0.0
    %106 = vmatprep.subr.mxu0 0.0
    %107 = vmatpush2.msra.mxu0 0.0
    %108 = vmatprep.subr.mxu0 0.0
    %109 = vmatpush2.msra.mxu0 0.0
    %110 = vmatprep.subr.mxu0 0.0
    %111 = vmatpush2.msra.mxu0 0.0
    %112 = vmatprep.subr.mxu0 0.0
    %113 = vmatpush2.msra.mxu0 0.0
    %114 = vmatprep.subr.mxu0 0.0
    %115 = vmatpush2.msra.mxu0 0.0
    %116 = vmatprep.mubr.f32.mxu0 0.0
    %117 = vmatmul.mubr.f32.gmra.mxu0 %v50
    %v118 = vpop.f32.mrf.mxu0
    %v119 = vadd.f32 %v46, %v118
    %v120 = vpop.f32.mrf.mxu0
    %121 = vdwg.mxu0
    %v122 = vld [vmem:[%s2] sm:$0xff]
    %v123 = vld [vmem:[%s2 + $0x8] sm:$0xff]
    %v124 = vld [vmem:[%s2 + $0x10] sm:$0xff]
    %v125 = vld [vmem:[%s2 + $0x18] sm:$0xff]
    %vm126 = vcmask 261120
    %v128 = vsel %vm126, 0.0, 0
    %130 = vmatprep.subr.mxu0 0.0
    %131 = vmatpush1.msra.mxu0 0.0
    %132 = vmatprep.subr.mxu0 0.0
    %133 = vmatpush1.msra.mxu0 0.0
    %134 = vmatprep.subr.mxu0 0.0
    %135 = vmatpush1.msra.mxu0 0.0
    %136 = vmatprep.subr.mxu0 0.0
    %137 = vmatpush1.msra.mxu0 0.0
    %138 = vmatprep.subr.mxu0 0.0
    %139 = vmatpush1.msra.mxu0 0.0
    %140 = vmatprep.subr.mxu0 0.0
    %141 = vmatpush1.msra.mxu0 0.0
    %142 = vmatprep.subr.mxu0 0.0
    %143 = vmatpush1.msra.mxu0 0.0
    %144 = vmatprep.subr.mxu0 0.0
    %145 = vmatpush1.msra.mxu0 0.0
    %146 = vmatprep.subr.mxu0 0.0
    %147 = vmatpush1.msra.mxu0 0.0
    %148 = vmatprep.subr.mxu0 0.0
    %149 = vmatpush1.msra.mxu0 0.0
    %150 = vmatprep.subr.mxu0 0.0
    %151 = vmatpush1.msra.mxu0 0.0
    %152 = vmatprep.subr.mxu0 0.0
    %153 = vmatpush1.msra.mxu0 0.0
    %154 = vmatprep.subr.mxu0 0.0
    %155 = vmatpush1.msra.mxu0 %v125
    %156 = vmatprep.subr.mxu0 0.0
    %157 = vmatpush1.msra.mxu0 %v124
    %158 = vmatprep.subr.mxu0 0.0
    %159 = vmatpush1.msra.mxu0 %v123
    %160 = vmatprep.subr.mxu0 0.0
    %161 = vmatpush1.msra.mxu0 %v122
    %162 = vmatprep.subr.mxu0 0.0
    %163 = vmatpush2.msra.mxu0 0.0
    %164 = vmatprep.subr.mxu0 0.0
    %165 = vmatpush2.msra.mxu0 0.0
    %166 = vmatprep.subr.mxu0 0.0
    %167 = vmatpush2.msra.mxu0 0.0
    %168 = vmatprep.subr.mxu0 0.0
    %169 = vmatpush2.msra.mxu0 0.0
    %170 = vmatprep.subr.mxu0 0.0
    %171 = vmatpush2.msra.mxu0 0.0
    %172 = vmatprep.subr.mxu0 0.0
    %173 = vmatpush2.msra.mxu0 0.0
    %174 = vmatprep.subr.mxu0 0.0
    %175 = vmatpush2.msra.mxu0 0.0
    %176 = vmatprep.subr.mxu0 0.0
    %177 = vmatpush2.msra.mxu0 0.0
    %178 = vmatprep.subr.mxu0 0.0
    %179 = vmatpush2.msra.mxu0 0.0
    %180 = vmatprep.subr.mxu0 0.0
    %181 = vmatpush2.msra.mxu0 0.0
    %182 = vmatprep.subr.mxu0 0.0
    %183 = vmatpush2.msra.mxu0 0.0
    %184 = vmatprep.subr.mxu0 0.0
    %185 = vmatpush2.msra.mxu0 0.0
    %186 = vmatprep.subr.mxu0 0.0
    %187 = vmatpush2.msra.mxu0 0.0
    %188 = vmatprep.subr.mxu0 0.0
    %189 = vmatpush2.msra.mxu0 0.0
    %190 = vmatprep.subr.mxu0 0.0
    %191 = vmatpush2.msra.mxu0 0.0
    %192 = vmatprep.subr.mxu0 0.0
    %193 = vmatpush2.msra.mxu0 0.0
    %194 = vmatprep.mubr.f32.mxu0 0.0
    %195 = vmatmul.mubr.f32.gmra.mxu0 %v128
    %v196 = vpop.f32.mrf.mxu0
    %v197 = vadd.f32 0.0, %v196
    %v198 = vpop.f32.mrf.mxu0
    %199 = vdwg.mxu0
    %v200 = vadd.f32 %v119, %v197
    %v201 = vxor.u32 %v200, 2147483648
    %v202 = vmul.f32 %v201, 1.442695
    %v203 = vpow.pop %v202
    %v204 = vadd.f32 %v203, 1.0
    %v205 = vrcp.pop %v204
    %v206 = vmul.f32 1.0, %v205
    %v207 = vtanh.pop %v200
    %v208 = vmul.f32 %v206, 0.0
    %210 = vrot.lane.b32.xlu0 %v207, 64
    %v211 = vpop.permute.xlu0 %210
    %v213 = vmul.f32 %v206, %v211
    %215 = vrot.lane.b32.xlu0 %v213, 32
    %v216 = vpop.permute.xlu0 %215
    %v218 = vadd.f32 %v208, %v216
    %v219 = vtanh.pop %v218
    %221 = vrot.lane.b32.xlu0 %v219, 64
    %v222 = vpop.permute.xlu0 %221
    %v224 = vmul.f32 %v206, %v222
    %226 = vrot.lane.b32.xlu0 %v224, 32
    %v227 = vpop.permute.xlu0 %226
    %v228 = vsel %vm126, %v227, 0
    %230 = vmatprep.subr.mxu0 0.0
    %231 = vmatpush1.msra.mxu0 0.0
    %232 = vmatprep.subr.mxu0 0.0
    %233 = vmatpush1.msra.mxu0 0.0
    %234 = vmatprep.subr.mxu0 0.0
    %235 = vmatpush1.msra.mxu0 0.0
    %236 = vmatprep.subr.mxu0 0.0
    %237 = vmatpush1.msra.mxu0 0.0
    %238 = vmatprep.subr.mxu0 0.0
    %239 = vmatpush1.msra.mxu0 0.0
    %240 = vmatprep.subr.mxu0 0.0
    %241 = vmatpush1.msra.mxu0 0.0
    %242 = vmatprep.subr.mxu0 0.0
    %243 = vmatpush1.msra.mxu0 0.0
    %244 = vmatprep.subr.mxu0 0.0
    %245 = vmatpush1.msra.mxu0 0.0
    %246 = vmatprep.subr.mxu0 0.0
    %247 = vmatpush1.msra.mxu0 0.0
    %248 = vmatprep.subr.mxu0 0.0
    %249 = vmatpush1.msra.mxu0 0.0
    %250 = vmatprep.subr.mxu0 0.0
    %251 = vmatpush1.msra.mxu0 0.0
    %252 = vmatprep.subr.mxu0 0.0
    %253 = vmatpush1.msra.mxu0 0.0
    %254 = vmatprep.subr.mxu0 0.0
    %255 = vmatpush1.msra.mxu0 %v125
    %256 = vmatprep.subr.mxu0 0.0
    %257 = vmatpush1.msra.mxu0 %v124
    %258 = vmatprep.subr.mxu0 0.0
    %259 = vmatpush1.msra.mxu0 %v123
    %260 = vmatprep.subr.mxu0 0.0
    %261 = vmatpush1.msra.mxu0 %v122
    %262 = vmatprep.subr.mxu0 0.0
    %263 = vmatpush2.msra.mxu0 0.0
    %264 = vmatprep.subr.mxu0 0.0
    %265 = vmatpush2.msra.mxu0 0.0
    %266 = vmatprep.subr.mxu0 0.0
    %267 = vmatpush2.msra.mxu0 0.0
    %268 = vmatprep.subr.mxu0 0.0
    %269 = vmatpush2.msra.mxu0 0.0
    %270 = vmatprep.subr.mxu0 0.0
    %271 = vmatpush2.msra.mxu0 0.0
    %272 = vmatprep.subr.mxu0 0.0
    %273 = vmatpush2.msra.mxu0 0.0
    %274 = vmatprep.subr.mxu0 0.0
    %275 = vmatpush2.msra.mxu0 0.0
    %276 = vmatprep.subr.mxu0 0.0
    %277 = vmatpush2.msra.mxu0 0.0
    %278 = vmatprep.subr.mxu0 0.0
    %279 = vmatpush2.msra.mxu0 0.0
    %280 = vmatprep.subr.mxu0 0.0
    %281 = vmatpush2.msra.mxu0 0.0
    %282 = vmatprep.subr.mxu0 0.0
    %283 = vmatpush2.msra.mxu0 0.0
    %284 = vmatprep.subr.mxu0 0.0
    %285 = vmatpush2.msra.mxu0 0.0
    %286 = vmatprep.subr.mxu0 0.0
    %287 = vmatpush2.msra.mxu0 0.0
    %288 = vmatprep.subr.mxu0 0.0
    %289 = vmatpush2.msra.mxu0 0.0
    %290 = vmatprep.subr.mxu0 0.0
    %291 = vmatpush2.msra.mxu0 0.0
    %292 = vmatprep.subr.mxu0 0.0
    %293 = vmatpush2.msra.mxu0 0.0
    %294 = vmatprep.mubr.f32.mxu0 0.0
    %295 = vmatmul.mubr.f32.gmra.mxu0 %v228
    %v296 = vpop.f32.mrf.mxu0
    %v297 = vadd.f32 0.0, %v296
    %v298 = vpop.f32.mrf.mxu0
    %299 = vdwg.mxu0
    %v301 = vrot.slane %v297, 7
    %v303 = vadd.f32 %v119, %v301
    %v304 = vxor.u32 %v303, 2147483648
    %v305 = vmul.f32 %v304, 1.442695
    %v306 = vpow.pop %v305
    %v307 = vadd.f32 %v306, 1.0
    %v308 = vrcp.pop %v307
    %v309 = vmul.f32 1.0, %v308
    %v310 = vtanh.pop %v303
    %v312 = vrot.slane %v218, 7
    %v314 = vmul.f32 %v309, %v312
    %316 = vrot.lane.b32.xlu0 %v310, 64
    %v317 = vpop.permute.xlu0 %316
    %v319 = vmul.f32 %v309, %v317
    %321 = vrot.lane.b32.xlu0 %v319, 32
    %v322 = vpop.permute.xlu0 %321
    %v324 = vadd.f32 %v314, %v322
    %v325 = vtanh.pop %v324
    %327 = vrot.lane.b32.xlu0 %v325, 64
    %v328 = vpop.permute.xlu0 %327
    %v330 = vmul.f32 %v309, %v328
    %v332 = vrot.slane %v330, 1
    %333 = vrot.lane.b32.xlu0 %v332, 32
    %v334 = vpop.permute.xlu0 %333
    %v335 = vsel %vm126, %v334, 0
    %337 = vmatprep.subr.mxu0 0.0
    %338 = vmatpush1.msra.mxu0 0.0
    %339 = vmatprep.subr.mxu0 0.0
    %340 = vmatpush1.msra.mxu0 0.0
    %341 = vmatprep.subr.mxu0 0.0
    %342 = vmatpush1.msra.mxu0 0.0
    %343 = vmatprep.subr.mxu0 0.0
    %344 = vmatpush1.msra.mxu0 0.0
    %345 = vmatprep.subr.mxu0 0.0
    %346 = vmatpush1.msra.mxu0 0.0
    %347 = vmatprep.subr.mxu0 0.0
    %348 = vmatpush1.msra.mxu0 0.0
    %349 = vmatprep.subr.mxu0 0.0
    %350 = vmatpush1.msra.mxu0 0.0
    %351 = vmatprep.subr.mxu0 0.0
    %352 = vmatpush1.msra.mxu0 0.0
    %353 = vmatprep.subr.mxu0 0.0
    %354 = vmatpush1.msra.mxu0 0.0
    %355 = vmatprep.subr.mxu0 0.0
    %356 = vmatpush1.msra.mxu0 0.0
    %357 = vmatprep.subr.mxu0 0.0
    %358 = vmatpush1.msra.mxu0 0.0
    %359 = vmatprep.subr.mxu0 0.0
    %360 = vmatpush1.msra.mxu0 0.0
    %361 = vmatprep.subr.mxu0 0.0
    %362 = vmatpush1.msra.mxu0 %v125
    %363 = vmatprep.subr.mxu0 0.0
    %364 = vmatpush1.msra.mxu0 %v124
    %365 = vmatprep.subr.mxu0 0.0
    %366 = vmatpush1.msra.mxu0 %v123
    %367 = vmatprep.subr.mxu0 0.0
    %368 = vmatpush1.msra.mxu0 %v122
    %369 = vmatprep.subr.mxu0 0.0
    %370 = vmatpush2.msra.mxu0 0.0
    %371 = vmatprep.subr.mxu0 0.0
    %372 = vmatpush2.msra.mxu0 0.0
    %373 = vmatprep.subr.mxu0 0.0
    %374 = vmatpush2.msra.mxu0 0.0
    %375 = vmatprep.subr.mxu0 0.0
    %376 = vmatpush2.msra.mxu0 0.0
    %377 = vmatprep.subr.mxu0 0.0
    %378 = vmatpush2.msra.mxu0 0.0
    %379 = vmatprep.subr.mxu0 0.0
    %380 = vmatpush2.msra.mxu0 0.0
    %381 = vmatprep.subr.mxu0 0.0
    %382 = vmatpush2.msra.mxu0 0.0
    %383 = vmatprep.subr.mxu0 0.0
    %384 = vmatpush2.msra.mxu0 0.0
    %385 = vmatprep.subr.mxu0 0.0
    %386 = vmatpush2.msra.mxu0 0.0
    %387 = vmatprep.subr.mxu0 0.0
    %388 = vmatpush2.msra.mxu0 0.0
    %389 = vmatprep.subr.mxu0 0.0
    %390 = vmatpush2.msra.mxu0 0.0
    %391 = vmatprep.subr.mxu0 0.0
    %392 = vmatpush2.msra.mxu0 0.0
    %393 = vmatprep.subr.mxu0 0.0
    %394 = vmatpush2.msra.mxu0 0.0
    %395 = vmatprep.subr.mxu0 0.0
    %396 = vmatpush2.msra.mxu0 0.0
    %397 = vmatprep.subr.mxu0 0.0
    %398 = vmatpush2.msra.mxu0 0.0
    %399 = vmatprep.subr.mxu0 0.0
    %400 = vmatpush2.msra.mxu0 0.0
    %401 = vmatprep.mubr.f32.mxu0 0.0
    %402 = vmatmul.mubr.f32.gmra.mxu0 %v335
    %v403 = vpop.f32.mrf.mxu0
    %v404 = vadd.f32 0.0, %v403
    %v405 = vpop.f32.mrf.mxu0
    %406 = vdwg.mxu0
    %v408 = vrot.slane %v404, 6
    %v410 = vadd.f32 %v119, %v408
    %v411 = vxor.u32 %v410, 2147483648
    %v412 = vmul.f32 %v411, 1.442695
    %v413 = vpow.pop %v412
    %v414 = vadd.f32 %v413, 1.0
    %v415 = vrcp.pop %v414
    %v416 = vmul.f32 1.0, %v415
    %v417 = vtanh.pop %v410
    %v419 = vrot.slane %v324, 7
    %v421 = vmul.f32 %v416, %v419
    %423 = vrot.lane.b32.xlu0 %v417, 64
    %v424 = vpop.permute.xlu0 %423
    %v426 = vmul.f32 %v416, %v424
    %428 = vrot.lane.b32.xlu0 %v426, 32
    %v429 = vpop.permute.xlu0 %428
    %v431 = vadd.f32 %v421, %v429
    %v432 = vtanh.pop %v431
    %434 = vrot.lane.b32.xlu0 %v432, 64
    %v435 = vpop.permute.xlu0 %434
    %v437 = vmul.f32 %v416, %v435
    %v439 = vrot.slane %v437, 2
    %440 = vrot.lane.b32.xlu0 %v439, 32
    %v441 = vpop.permute.xlu0 %440
    %v442 = vsel %vm126, %v441, 0
    %444 = vmatprep.subr.mxu0 0.0
    %445 = vmatpush1.msra.mxu0 0.0
    %446 = vmatprep.subr.mxu0 0.0
    %447 = vmatpush1.msra.mxu0 0.0
    %448 = vmatprep.subr.mxu0 0.0
    %449 = vmatpush1.msra.mxu0 0.0
    %450 = vmatprep.subr.mxu0 0.0
    %451 = vmatpush1.msra.mxu0 0.0
    %452 = vmatprep.subr.mxu0 0.0
    %453 = vmatpush1.msra.mxu0 0.0
    %454 = vmatprep.subr.mxu0 0.0
    %455 = vmatpush1.msra.mxu0 0.0
    %456 = vmatprep.subr.mxu0 0.0
    %457 = vmatpush1.msra.mxu0 0.0
    %458 = vmatprep.subr.mxu0 0.0
    %459 = vmatpush1.msra.mxu0 0.0
    %460 = vmatprep.subr.mxu0 0.0
    %461 = vmatpush1.msra.mxu0 0.0
    %462 = vmatprep.subr.mxu0 0.0
    %463 = vmatpush1.msra.mxu0 0.0
    %464 = vmatprep.subr.mxu0 0.0
    %465 = vmatpush1.msra.mxu0 0.0
    %466 = vmatprep.subr.mxu0 0.0
    %467 = vmatpush1.msra.mxu0 0.0
    %468 = vmatprep.subr.mxu0 0.0
    %469 = vmatpush1.msra.mxu0 %v125
    %470 = vmatprep.subr.mxu0 0.0
    %471 = vmatpush1.msra.mxu0 %v124
    %472 = vmatprep.subr.mxu0 0.0
    %473 = vmatpush1.msra.mxu0 %v123
    %474 = vmatprep.subr.mxu0 0.0
    %475 = vmatpush1.msra.mxu0 %v122
    %476 = vmatprep.subr.mxu0 0.0
    %477 = vmatpush2.msra.mxu0 0.0
    %478 = vmatprep.subr.mxu0 0.0
    %479 = vmatpush2.msra.mxu0 0.0
    %480 = vmatprep.subr.mxu0 0.0
    %481 = vmatpush2.msra.mxu0 0.0
    %482 = vmatprep.subr.mxu0 0.0
    %483 = vmatpush2.msra.mxu0 0.0
    %484 = vmatprep.subr.mxu0 0.0
    %485 = vmatpush2.msra.mxu0 0.0
    %486 = vmatprep.subr.mxu0 0.0
    %487 = vmatpush2.msra.mxu0 0.0
    %488 = vmatprep.subr.mxu0 0.0
    %489 = vmatpush2.msra.mxu0 0.0
    %490 = vmatprep.subr.mxu0 0.0
    %491 = vmatpush2.msra.mxu0 0.0
    %492 = vmatprep.subr.mxu0 0.0
    %493 = vmatpush2.msra.mxu0 0.0
    %494 = vmatprep.subr.mxu0 0.0
    %495 = vmatpush2.msra.mxu0 0.0
    %496 = vmatprep.subr.mxu0 0.0
    %497 = vmatpush2.msra.mxu0 0.0
    %498 = vmatprep.subr.mxu0 0.0
    %499 = vmatpush2.msra.mxu0 0.0
    %500 = vmatprep.subr.mxu0 0.0
    %501 = vmatpush2.msra.mxu0 0.0
    %502 = vmatprep.subr.mxu0 0.0
    %503 = vmatpush2.msra.mxu0 0.0
    %504 = vmatprep.subr.mxu0 0.0
    %505 = vmatpush2.msra.mxu0 0.0
    %506 = vmatprep.subr.mxu0 0.0
    %507 = vmatpush2.msra.mxu0 0.0
    %508 = vmatprep.mubr.f32.mxu0 0.0
    %509 = vmatmul.mubr.f32.gmra.mxu0 %v442
    %v510 = vpop.f32.mrf.mxu0
    %v511 = vadd.f32 0.0, %v510
    %v512 = vpop.f32.mrf.mxu0
    %513 = vdwg.mxu0
    %v515 = vrot.slane %v511, 5
    %v517 = vadd.f32 %v119, %v515
    %v518 = vxor.u32 %v517, 2147483648
    %v519 = vmul.f32 %v518, 1.442695
    %v520 = vpow.pop %v519
    %v521 = vadd.f32 %v520, 1.0
    %v522 = vrcp.pop %v521
    %v523 = vmul.f32 1.0, %v522
    %v524 = vtanh.pop %v517
    %v526 = vrot.slane %v431, 7
    %v528 = vmul.f32 %v523, %v526
    %530 = vrot.lane.b32.xlu0 %v524, 64
    %v531 = vpop.permute.xlu0 %530
    %v533 = vmul.f32 %v523, %v531
    %535 = vrot.lane.b32.xlu0 %v533, 32
    %v536 = vpop.permute.xlu0 %535
    %v538 = vadd.f32 %v528, %v536
    %v539 = vtanh.pop %v538
    %541 = vrot.lane.b32.xlu0 %v539, 64
    %v542 = vpop.permute.xlu0 %541
    %v544 = vmul.f32 %v523, %v542
    %v546 = vrot.slane %v544, 3
    %547 = vrot.lane.b32.xlu0 %v546, 32
    %v548 = vpop.permute.xlu0 %547
    %v549 = vsel %vm126, %v548, 0
    %551 = vmatprep.subr.mxu0 0.0
    %552 = vmatpush1.msra.mxu0 0.0
    %553 = vmatprep.subr.mxu0 0.0
    %554 = vmatpush1.msra.mxu0 0.0
    %555 = vmatprep.subr.mxu0 0.0
    %556 = vmatpush1.msra.mxu0 0.0
    %557 = vmatprep.subr.mxu0 0.0
    %558 = vmatpush1.msra.mxu0 0.0
    %559 = vmatprep.subr.mxu0 0.0
    %560 = vmatpush1.msra.mxu0 0.0
    %561 = vmatprep.subr.mxu0 0.0
    %562 = vmatpush1.msra.mxu0 0.0
    %563 = vmatprep.subr.mxu0 0.0
    %564 = vmatpush1.msra.mxu0 0.0
    %565 = vmatprep.subr.mxu0 0.0
    %566 = vmatpush1.msra.mxu0 0.0
    %567 = vmatprep.subr.mxu0 0.0
    %568 = vmatpush1.msra.mxu0 0.0
    %569 = vmatprep.subr.mxu0 0.0
    %570 = vmatpush1.msra.mxu0 0.0
    %571 = vmatprep.subr.mxu0 0.0
    %572 = vmatpush1.msra.mxu0 0.0
    %573 = vmatprep.subr.mxu0 0.0
    %574 = vmatpush1.msra.mxu0 0.0
    %575 = vmatprep.subr.mxu0 0.0
    %576 = vmatpush1.msra.mxu0 %v125
    %577 = vmatprep.subr.mxu0 0.0
    %578 = vmatpush1.msra.mxu0 %v124
    %579 = vmatprep.subr.mxu0 0.0
    %580 = vmatpush1.msra.mxu0 %v123
    %581 = vmatprep.subr.mxu0 0.0
    %582 = vmatpush1.msra.mxu0 %v122
    %583 = vmatprep.subr.mxu0 0.0
    %584 = vmatpush2.msra.mxu0 0.0
    %585 = vmatprep.subr.mxu0 0.0
    %586 = vmatpush2.msra.mxu0 0.0
    %587 = vmatprep.subr.mxu0 0.0
    %588 = vmatpush2.msra.mxu0 0.0
    %589 = vmatprep.subr.mxu0 0.0
    %590 = vmatpush2.msra.mxu0 0.0
    %591 = vmatprep.subr.mxu0 0.0
    %592 = vmatpush2.msra.mxu0 0.0
    %593 = vmatprep.subr.mxu0 0.0
    %594 = vmatpush2.msra.mxu0 0.0
    %595 = vmatprep.subr.mxu0 0.0
    %596 = vmatpush2.msra.mxu0 0.0
    %597 = vmatprep.subr.mxu0 0.0
    %598 = vmatpush2.msra.mxu0 0.0
    %599 = vmatprep.subr.mxu0 0.0
    %600 = vmatpush2.msra.mxu0 0.0
    %601 = vmatprep.subr.mxu0 0.0
    %602 = vmatpush2.msra.mxu0 0.0
    %603 = vmatprep.subr.mxu0 0.0
    %604 = vmatpush2.msra.mxu0 0.0
    %605 = vmatprep.subr.mxu0 0.0
    %606 = vmatpush2.msra.mxu0 0.0
    %607 = vmatprep.subr.mxu0 0.0
    %608 = vmatpush2.msra.mxu0 0.0
    %609 = vmatprep.subr.mxu0 0.0
    %610 = vmatpush2.msra.mxu0 0.0
    %611 = vmatprep.subr.mxu0 0.0
    %612 = vmatpush2.msra.mxu0 0.0
    %613 = vmatprep.subr.mxu0 0.0
    %614 = vmatpush2.msra.mxu0 0.0
    %615 = vmatprep.mubr.f32.mxu0 0.0
    %616 = vmatmul.mubr.f32.gmra.mxu0 %v549
    %v617 = vpop.f32.mrf.mxu0
    %v618 = vadd.f32 0.0, %v617
    %v619 = vpop.f32.mrf.mxu0
    %620 = vdwg.mxu0
    %v622 = vrot.slane %v618, 4
    %v624 = vadd.f32 %v119, %v622
    %v625 = vxor.u32 %v624, 2147483648
    %v626 = vmul.f32 %v625, 1.442695
    %v627 = vpow.pop %v626
    %v628 = vadd.f32 %v627, 1.0
    %v629 = vrcp.pop %v628
    %v630 = vmul.f32 1.0, %v629
    %v631 = vtanh.pop %v624
    %v633 = vrot.slane %v538, 7
    %v635 = vmul.f32 %v630, %v633
    %637 = vrot.lane.b32.xlu0 %v631, 64
    %v638 = vpop.permute.xlu0 %637
    %v640 = vmul.f32 %v630, %v638
    %642 = vrot.lane.b32.xlu0 %v640, 32
    %v643 = vpop.permute.xlu0 %642
    %v645 = vadd.f32 %v635, %v643
    %v646 = vtanh.pop %v645
    %648 = vrot.lane.b32.xlu0 %v646, 64
    %v649 = vpop.permute.xlu0 %648
    %v651 = vmul.f32 %v630, %v649
    %v653 = vrot.slane %v651, 4
    %654 = vrot.lane.b32.xlu0 %v653, 32
    %v655 = vpop.permute.xlu0 %654
    %v656 = vsel %vm126, %v655, 0
    %658 = vmatprep.subr.mxu0 0.0
    %659 = vmatpush1.msra.mxu0 0.0
    %660 = vmatprep.subr.mxu0 0.0
    %661 = vmatpush1.msra.mxu0 0.0
    %662 = vmatprep.subr.mxu0 0.0
    %663 = vmatpush1.msra.mxu0 0.0
    %664 = vmatprep.subr.mxu0 0.0
    %665 = vmatpush1.msra.mxu0 0.0
    %666 = vmatprep.subr.mxu0 0.0
    %667 = vmatpush1.msra.mxu0 0.0
    %668 = vmatprep.subr.mxu0 0.0
    %669 = vmatpush1.msra.mxu0 0.0
    %670 = vmatprep.subr.mxu0 0.0
    %671 = vmatpush1.msra.mxu0 0.0
    %672 = vmatprep.subr.mxu0 0.0
    %673 = vmatpush1.msra.mxu0 0.0
    %674 = vmatprep.subr.mxu0 0.0
    %675 = vmatpush1.msra.mxu0 0.0
    %676 = vmatprep.subr.mxu0 0.0
    %677 = vmatpush1.msra.mxu0 0.0
    %678 = vmatprep.subr.mxu0 0.0
    %679 = vmatpush1.msra.mxu0 0.0
    %680 = vmatprep.subr.mxu0 0.0
    %681 = vmatpush1.msra.mxu0 0.0
    %682 = vmatprep.subr.mxu0 0.0
    %683 = vmatpush1.msra.mxu0 %v125
    %684 = vmatprep.subr.mxu0 0.0
    %685 = vmatpush1.msra.mxu0 %v124
    %686 = vmatprep.subr.mxu0 0.0
    %687 = vmatpush1.msra.mxu0 %v123
    %688 = vmatprep.subr.mxu0 0.0
    %689 = vmatpush1.msra.mxu0 %v122
    %690 = vmatprep.subr.mxu0 0.0
    %691 = vmatpush2.msra.mxu0 0.0
    %692 = vmatprep.subr.mxu0 0.0
    %693 = vmatpush2.msra.mxu0 0.0
    %694 = vmatprep.subr.mxu0 0.0
    %695 = vmatpush2.msra.mxu0 0.0
    %696 = vmatprep.subr.mxu0 0.0
    %697 = vmatpush2.msra.mxu0 0.0
    %698 = vmatprep.subr.mxu0 0.0
    %699 = vmatpush2.msra.mxu0 0.0
    %700 = vmatprep.subr.mxu0 0.0
    %701 = vmatpush2.msra.mxu0 0.0
    %702 = vmatprep.subr.mxu0 0.0
    %703 = vmatpush2.msra.mxu0 0.0
    %704 = vmatprep.subr.mxu0 0.0
    %705 = vmatpush2.msra.mxu0 0.0
    %706 = vmatprep.subr.mxu0 0.0
    %707 = vmatpush2.msra.mxu0 0.0
    %708 = vmatprep.subr.mxu0 0.0
    %709 = vmatpush2.msra.mxu0 0.0
    %710 = vmatprep.subr.mxu0 0.0
    %711 = vmatpush2.msra.mxu0 0.0
    %712 = vmatprep.subr.mxu0 0.0
    %713 = vmatpush2.msra.mxu0 0.0
    %714 = vmatprep.subr.mxu0 0.0
    %715 = vmatpush2.msra.mxu0 0.0
    %716 = vmatprep.subr.mxu0 0.0
    %717 = vmatpush2.msra.mxu0 0.0
    %718 = vmatprep.subr.mxu0 0.0
    %719 = vmatpush2.msra.mxu0 0.0
    %720 = vmatprep.subr.mxu0 0.0
    %721 = vmatpush2.msra.mxu0 0.0
    %722 = vmatprep.mubr.f32.mxu0 0.0
    %723 = vmatmul.mubr.f32.gmra.mxu0 %v656
    %v724 = vpop.f32.mrf.mxu0
    %v725 = vadd.f32 0.0, %v724
    %v726 = vpop.f32.mrf.mxu0
    %727 = vdwg.mxu0
    %v729 = vrot.slane %v725, 3
    %v731 = vadd.f32 %v119, %v729
    %v732 = vxor.u32 %v731, 2147483648
    %v733 = vmul.f32 %v732, 1.442695
    %v734 = vpow.pop %v733
    %v735 = vadd.f32 %v734, 1.0
    %v736 = vrcp.pop %v735
    %v737 = vmul.f32 1.0, %v736
    %v738 = vtanh.pop %v731
    %v740 = vrot.slane %v645, 7
    %v742 = vmul.f32 %v737, %v740
    %744 = vrot.lane.b32.xlu0 %v738, 64
    %v745 = vpop.permute.xlu0 %744
    %v747 = vmul.f32 %v737, %v745
    %749 = vrot.lane.b32.xlu0 %v747, 32
    %v750 = vpop.permute.xlu0 %749
    %v752 = vadd.f32 %v742, %v750
    %v753 = vtanh.pop %v752
    %755 = vrot.lane.b32.xlu0 %v753, 64
    %v756 = vpop.permute.xlu0 %755
    %v758 = vmul.f32 %v737, %v756
    %v760 = vrot.slane %v758, 5
    %761 = vrot.lane.b32.xlu0 %v760, 32
    %v762 = vpop.permute.xlu0 %761
    %v763 = vsel %vm126, %v762, 0
    %765 = vmatprep.subr.mxu0 0.0
    %766 = vmatpush1.msra.mxu0 0.0
    %767 = vmatprep.subr.mxu0 0.0
    %768 = vmatpush1.msra.mxu0 0.0
    %769 = vmatprep.subr.mxu0 0.0
    %770 = vmatpush1.msra.mxu0 0.0
    %771 = vmatprep.subr.mxu0 0.0
    %772 = vmatpush1.msra.mxu0 0.0
    %773 = vmatprep.subr.mxu0 0.0
    %774 = vmatpush1.msra.mxu0 0.0
    %775 = vmatprep.subr.mxu0 0.0
    %776 = vmatpush1.msra.mxu0 0.0
    %777 = vmatprep.subr.mxu0 0.0
    %778 = vmatpush1.msra.mxu0 0.0
    %779 = vmatprep.subr.mxu0 0.0
    %780 = vmatpush1.msra.mxu0 0.0
    %781 = vmatprep.subr.mxu0 0.0
    %782 = vmatpush1.msra.mxu0 0.0
    %783 = vmatprep.subr.mxu0 0.0
    %784 = vmatpush1.msra.mxu0 0.0
    %785 = vmatprep.subr.mxu0 0.0
    %786 = vmatpush1.msra.mxu0 0.0
    %787 = vmatprep.subr.mxu0 0.0
    %788 = vmatpush1.msra.mxu0 0.0
    %789 = vmatprep.subr.mxu0 0.0
    %790 = vmatpush1.msra.mxu0 %v125
    %791 = vmatprep.subr.mxu0 0.0
    %792 = vmatpush1.msra.mxu0 %v124
    %793 = vmatprep.subr.mxu0 0.0
    %794 = vmatpush1.msra.mxu0 %v123
    %795 = vmatprep.subr.mxu0 0.0
    %796 = vmatpush1.msra.mxu0 %v122
    %797 = vmatprep.subr.mxu0 0.0
    %798 = vmatpush2.msra.mxu0 0.0
    %799 = vmatprep.subr.mxu0 0.0
    %800 = vmatpush2.msra.mxu0 0.0
    %801 = vmatprep.subr.mxu0 0.0
    %802 = vmatpush2.msra.mxu0 0.0
    %803 = vmatprep.subr.mxu0 0.0
    %804 = vmatpush2.msra.mxu0 0.0
    %805 = vmatprep.subr.mxu0 0.0
    %806 = vmatpush2.msra.mxu0 0.0
    %807 = vmatprep.subr.mxu0 0.0
    %808 = vmatpush2.msra.mxu0 0.0
    %809 = vmatprep.subr.mxu0 0.0
    %810 = vmatpush2.msra.mxu0 0.0
    %811 = vmatprep.subr.mxu0 0.0
    %812 = vmatpush2.msra.mxu0 0.0
    %813 = vmatprep.subr.mxu0 0.0
    %814 = vmatpush2.msra.mxu0 0.0
    %815 = vmatprep.subr.mxu0 0.0
    %816 = vmatpush2.msra.mxu0 0.0
    %817 = vmatprep.subr.mxu0 0.0
    %818 = vmatpush2.msra.mxu0 0.0
    %819 = vmatprep.subr.mxu0 0.0
    %820 = vmatpush2.msra.mxu0 0.0
    %821 = vmatprep.subr.mxu0 0.0
    %822 = vmatpush2.msra.mxu0 0.0
    %823 = vmatprep.subr.mxu0 0.0
    %824 = vmatpush2.msra.mxu0 0.0
    %825 = vmatprep.subr.mxu0 0.0
    %826 = vmatpush2.msra.mxu0 0.0
    %827 = vmatprep.subr.mxu0 0.0
    %828 = vmatpush2.msra.mxu0 0.0
    %829 = vmatprep.mubr.f32.mxu0 0.0
    %830 = vmatmul.mubr.f32.gmra.mxu0 %v763
    %v831 = vpop.f32.mrf.mxu0
    %v832 = vadd.f32 0.0, %v831
    %v833 = vpop.f32.mrf.mxu0
    %834 = vdwg.mxu0
    %v836 = vrot.slane %v832, 2
    %v838 = vadd.f32 %v119, %v836
    %v839 = vxor.u32 %v838, 2147483648
    %v840 = vmul.f32 %v839, 1.442695
    %v841 = vpow.pop %v840
    %v842 = vadd.f32 %v841, 1.0
    %v843 = vrcp.pop %v842
    %v844 = vmul.f32 1.0, %v843
    %v845 = vtanh.pop %v838
    %v847 = vrot.slane %v752, 7
    %v849 = vmul.f32 %v844, %v847
    %851 = vrot.lane.b32.xlu0 %v845, 64
    %v852 = vpop.permute.xlu0 %851
    %v854 = vmul.f32 %v844, %v852
    %856 = vrot.lane.b32.xlu0 %v854, 32
    %v857 = vpop.permute.xlu0 %856
    %v859 = vadd.f32 %v849, %v857
    %v860 = vtanh.pop %v859
    %862 = vrot.lane.b32.xlu0 %v860, 64
    %v863 = vpop.permute.xlu0 %862
    %v865 = vmul.f32 %v844, %v863
    %v867 = vrot.slane %v865, 6
    %868 = vrot.lane.b32.xlu0 %v867, 32
    %v869 = vpop.permute.xlu0 %868
    %v870 = vsel %vm126, %v869, 0
    %872 = vmatprep.subr.mxu0 0.0
    %873 = vmatpush1.msra.mxu0 0.0
    %874 = vmatprep.subr.mxu0 0.0
    %875 = vmatpush1.msra.mxu0 0.0
    %876 = vmatprep.subr.mxu0 0.0
    %877 = vmatpush1.msra.mxu0 0.0
    %878 = vmatprep.subr.mxu0 0.0
    %879 = vmatpush1.msra.mxu0 0.0
    %880 = vmatprep.subr.mxu0 0.0
    %881 = vmatpush1.msra.mxu0 0.0
    %882 = vmatprep.subr.mxu0 0.0
    %883 = vmatpush1.msra.mxu0 0.0
    %884 = vmatprep.subr.mxu0 0.0
    %885 = vmatpush1.msra.mxu0 0.0
    %886 = vmatprep.subr.mxu0 0.0
    %887 = vmatpush1.msra.mxu0 0.0
    %888 = vmatprep.subr.mxu0 0.0
    %889 = vmatpush1.msra.mxu0 0.0
    %890 = vmatprep.subr.mxu0 0.0
    %891 = vmatpush1.msra.mxu0 0.0
    %892 = vmatprep.subr.mxu0 0.0
    %893 = vmatpush1.msra.mxu0 0.0
    %894 = vmatprep.subr.mxu0 0.0
    %895 = vmatpush1.msra.mxu0 0.0
    %896 = vmatprep.subr.mxu0 0.0
    %897 = vmatpush1.msra.mxu0 %v125
    %898 = vmatprep.subr.mxu0 0.0
    %899 = vmatpush1.msra.mxu0 %v124
    %900 = vmatprep.subr.mxu0 0.0
    %901 = vmatpush1.msra.mxu0 %v123
    %902 = vmatprep.subr.mxu0 0.0
    %903 = vmatpush1.msra.mxu0 %v122
    %904 = vmatprep.subr.mxu0 0.0
    %905 = vmatpush2.msra.mxu0 0.0
    %906 = vmatprep.subr.mxu0 0.0
    %907 = vmatpush2.msra.mxu0 0.0
    %908 = vmatprep.subr.mxu0 0.0
    %909 = vmatpush2.msra.mxu0 0.0
    %910 = vmatprep.subr.mxu0 0.0
    %911 = vmatpush2.msra.mxu0 0.0
    %912 = vmatprep.subr.mxu0 0.0
    %913 = vmatpush2.msra.mxu0 0.0
    %914 = vmatprep.subr.mxu0 0.0
    %915 = vmatpush2.msra.mxu0 0.0
    %916 = vmatprep.subr.mxu0 0.0
    %917 = vmatpush2.msra.mxu0 0.0
    %918 = vmatprep.subr.mxu0 0.0
    %919 = vmatpush2.msra.mxu0 0.0
    %920 = vmatprep.subr.mxu0 0.0
    %921 = vmatpush2.msra.mxu0 0.0
    %922 = vmatprep.subr.mxu0 0.0
    %923 = vmatpush2.msra.mxu0 0.0
    %924 = vmatprep.subr.mxu0 0.0
    %925 = vmatpush2.msra.mxu0 0.0
    %926 = vmatprep.subr.mxu0 0.0
    %927 = vmatpush2.msra.mxu0 0.0
    %928 = vmatprep.subr.mxu0 0.0
    %929 = vmatpush2.msra.mxu0 0.0
    %930 = vmatprep.subr.mxu0 0.0
    %931 = vmatpush2.msra.mxu0 0.0
    %932 = vmatprep.subr.mxu0 0.0
    %933 = vmatpush2.msra.mxu0 0.0
    %934 = vmatprep.subr.mxu0 0.0
    %935 = vmatpush2.msra.mxu0 0.0
    %936 = vmatprep.mubr.f32.mxu0 0.0
    %937 = vmatmul.mubr.f32.gmra.mxu0 %v870
    %v938 = vpop.f32.mrf.mxu0
    %v939 = vadd.f32 0.0, %v938
    %v940 = vpop.f32.mrf.mxu0
    %941 = vdwg.mxu0
    %v943 = vrot.slane %v939, 1
    %v945 = vadd.f32 %v119, %v943
    %v946 = vxor.u32 %v945, 2147483648
    %v947 = vmul.f32 %v946, 1.442695
    %v948 = vpow.pop %v947
    %v949 = vadd.f32 %v948, 1.0
    %v950 = vrcp.pop %v949
    %v951 = vmul.f32 1.0, %v950
    %v952 = vtanh.pop %v945
    %v954 = vrot.slane %v859, 7
    %v956 = vmul.f32 %v951, %v954
    %958 = vrot.lane.b32.xlu0 %v952, 64
    %v959 = vpop.permute.xlu0 %958
    %v961 = vmul.f32 %v951, %v959
    %963 = vrot.lane.b32.xlu0 %v961, 32
    %v964 = vpop.permute.xlu0 %963
    %v966 = vadd.f32 %v956, %v964
    %v967 = vtanh.pop %v966
    %969 = vrot.lane.b32.xlu0 %v967, 64
    %v970 = vpop.permute.xlu0 %969
    %v972 = vmul.f32 %v951, %v970
    %v973 = vld [vmem:[%s4] sm:$0xff]
    %v974 = vld [vmem:[%s4 + $0x8] sm:$0xff]
    %v975 = vld [vmem:[%s4 + $0x10] sm:$0xff]
    %v976 = vld [vmem:[%s4 + $0x18] sm:$0xff]
    %v977 = vld [vmem:[%s5] sm:$0x1]
    %v979 = vrot.slane %v972, 7
    %980 = vrot.lane.b32.xlu0 %v979, 32
    %v981 = vpop.permute.xlu0 %980
    %v982 = vsel %vm126, %v981, 0
    %984 = vmatprep.subr.mxu0 0.0
    %985 = vmatpush1.msra.mxu0 0.0
    %986 = vmatprep.subr.mxu0 0.0
    %987 = vmatpush1.msra.mxu0 0.0
    %988 = vmatprep.subr.mxu0 0.0
    %989 = vmatpush1.msra.mxu0 0.0
    %990 = vmatprep.subr.mxu0 0.0
    %991 = vmatpush1.msra.mxu0 0.0
    %992 = vmatprep.subr.mxu0 0.0
    %993 = vmatpush1.msra.mxu0 0.0
    %994 = vmatprep.subr.mxu0 0.0
    %995 = vmatpush1.msra.mxu0 0.0
    %996 = vmatprep.subr.mxu0 0.0
    %997 = vmatpush1.msra.mxu0 0.0
    %998 = vmatprep.subr.mxu0 0.0
    %999 = vmatpush1.msra.mxu0 0.0
    %1000 = vmatprep.subr.mxu0 0.0
    %1001 = vmatpush1.msra.mxu0 0.0
    %1002 = vmatprep.subr.mxu0 0.0
    %1003 = vmatpush1.msra.mxu0 0.0
    %1004 = vmatprep.subr.mxu0 0.0
    %1005 = vmatpush1.msra.mxu0 0.0
    %1006 = vmatprep.subr.mxu0 0.0
    %1007 = vmatpush1.msra.mxu0 0.0
    %1008 = vmatprep.subr.mxu0 0.0
    %1009 = vmatpush1.msra.mxu0 %v976
    %1010 = vmatprep.subr.mxu0 0.0
    %1011 = vmatpush1.msra.mxu0 %v975
    %1012 = vmatprep.subr.mxu0 0.0
    %1013 = vmatpush1.msra.mxu0 %v974
    %1014 = vmatprep.subr.mxu0 0.0
    %1015 = vmatpush1.msra.mxu0 %v973
    %1016 = vmatprep.subr.mxu0 0.0
    %1017 = vmatpush2.msra.mxu0 0.0
    %1018 = vmatprep.subr.mxu0 0.0
    %1019 = vmatpush2.msra.mxu0 0.0
    %1020 = vmatprep.subr.mxu0 0.0
    %1021 = vmatpush2.msra.mxu0 0.0
    %1022 = vmatprep.subr.mxu0 0.0
    %1023 = vmatpush2.msra.mxu0 0.0
    %1024 = vmatprep.subr.mxu0 0.0
    %1025 = vmatpush2.msra.mxu0 0.0
    %1026 = vmatprep.subr.mxu0 0.0
    %1027 = vmatpush2.msra.mxu0 0.0
    %1028 = vmatprep.subr.mxu0 0.0
    %1029 = vmatpush2.msra.mxu0 0.0
    %1030 = vmatprep.subr.mxu0 0.0
    %1031 = vmatpush2.msra.mxu0 0.0
    %1032 = vmatprep.subr.mxu0 0.0
    %1033 = vmatpush2.msra.mxu0 0.0
    %1034 = vmatprep.subr.mxu0 0.0
    %1035 = vmatpush2.msra.mxu0 0.0
    %1036 = vmatprep.subr.mxu0 0.0
    %1037 = vmatpush2.msra.mxu0 0.0
    %1038 = vmatprep.subr.mxu0 0.0
    %1039 = vmatpush2.msra.mxu0 0.0
    %1040 = vmatprep.subr.mxu0 0.0
    %1041 = vmatpush2.msra.mxu0 0.0
    %1042 = vmatprep.subr.mxu0 0.0
    %1043 = vmatpush2.msra.mxu0 0.0
    %1044 = vmatprep.subr.mxu0 0.0
    %1045 = vmatpush2.msra.mxu0 0.0
    %1046 = vmatprep.subr.mxu0 0.0
    %1047 = vmatpush2.msra.mxu0 0.0
    %1048 = vmatprep.mubr.f32.mxu0 0.0
    %1049 = vmatmul.mubr.f32.gmra.mxu0 %v982
    %v1050 = vpop.f32.mrf.mxu0
    %v1051 = vadd.f32 %v977, %v1050
    %v1052 = vpop.f32.mrf.mxu0
    %1053 = vdwg.mxu0
    %vm1054 = vcmask 57344
    %v1055 = vsel %vm1054, %v1051, -inf
    %1056 = vmax.xlane.f32.xlu0 %v1055
    %v1057 = vpop.xlane.xlu0 %1056
    %v1058 = vsub.f32 %v1051, %v1057
    %v1059 = vmul.f32 %v1058, 1.442695
    %v1060 = vpow.pop %v1059
    %v1061 = vsel %vm1054, %v1060, 0.0
    %1062 = vadd.xlane.f32.xlu0 %v1061
    %v1063 = vpop.xlane.xlu0 %1062
    %v1064 = vlog2.pop %v1063
    %v1065 = vmul.f32 %v1064, 0.6931472
    %v1066 = vadd.f32 %v1057, %v1065
    %v1067 = vsub.f32 %v1051, %v1066
    %1068 = vst.msk [vmem:[#allocation5] sm:$0x1] %vm1054, %v1067
    // Predicated region
    $region30: #{tpu_custom_call.1} parent=1 // pred_check
      _
    $region31: #{tpu_custom_call.1} parent=1 // pred_check_branch
      %1070 = sbr.rel (0) target = $region33
    $region32: #{tpu_custom_call.1} parent=1 // pred_region
      %s1072 = ssub.s32 16, 16
      %1073 = vsyncadd [#allocation4], %s1072
      %s1075 = sshll.u32 [#allocation5], 4
      %s1076 = int_to_ptr.vmem [resolvable:$true] %s1075
      %1078 = dma.vmem_to_hbm [thread:$0]  %s1076, 16, %s6, [#allocation4]
    $region33: #{tpu_custom_call.1} parent=1 // pred_fallthru
      _
    // Predicated region
    $region34: #{tpu_custom_call.1} parent=1 // pred_check
      _
    $region35: #{tpu_custom_call.1} parent=1 // pred_check_branch
      %1080 = sbr.rel (0) target = $region37
    $region36: #{tpu_custom_call.1} parent=1 // pred_region
      %1081 = dma.done [#allocation4], 16
    $region37: #{tpu_custom_call.1} parent=1 // pred_fallthru
      _
    %1082 = vsyncpa [#allocation3], 1
    %1083 = vsyncpa [#allocation4], 1

</llo_original>
